<compile_context>
chip_gen: v5e
topology: v5e:2x2
jax: 0.10.0
libtpu: 0.0.40
codegen_flags: <defaults>
</compile_context>

<pallas_src>
import jax
import jax.numpy as jnp
from jax.experimental import pallas as pl
from jax.experimental.pallas import tpu as pltpu


def _round_up(x, m):
    return ((x + m - 1) // m) * m


# VMEM sizing: the double-buffered working set must fit the tightest
# generation (v7x: 64 MiB physical / 32 MiB scoped-by-default per TensorCore).
_VMEM_WORKING_SET_BUDGET = 24 * 1024 * 1024
_VMEM_LIMIT_BYTES = 48 * 1024 * 1024  # explicit limit, below v7x's 64 MiB physical


def _ensemble_fc_kernel_single(x_ref, w_ref, b_ref, o_ref):
    # x_ref: (TB, IN), w_ref: (IN, TN), b_ref: (1, TN), o_ref: (TB, TN)
    acc = jnp.dot(x_ref[...], w_ref[...], preferred_element_type=jnp.float32)
    o_ref[...] = (acc + b_ref[...].astype(jnp.float32)).astype(o_ref.dtype)


def _ensemble_fc_kernel_packed(x_ref, w_ref, b_ref, o_ref):
    # x_ref: (EB, TB, IN), w_ref: (EB, IN, TN), b_ref: (EB, 1, TN), o_ref: (EB, TB, TN)
    acc = jnp.einsum("ebi,eio->ebo", x_ref[...], w_ref[...],
                     preferred_element_type=jnp.float32)
    o_ref[...] = (acc + b_ref[...].astype(jnp.float32)).astype(o_ref.dtype)


def _working_set_bytes(eb, tb, tn, in_features, in_itemsize, out_itemsize):
    per_step = (eb * tb * in_features + eb * in_features * tn + eb * tn) * in_itemsize \
               + eb * tb * tn * out_itemsize
    return 2 * per_step  # Pallas double-buffers each pipelined block


def ensemble_fc(x, weight, bias, *, compute_dtype=None,
                tb=None, tn=None, members_per_step=None):
    """Ensemble of independent linear layers.

    x: (E, B, IN), weight: (E, IN, OUT), bias: (E, OUT) -> (E, B, OUT).
    compute_dtype: optionally stream x/weight in this dtype (e.g. bf16);
    accumulation is always f32 and the output keeps x's original dtype.
    """
    E, B, IN = x.shape
    E_w, IN_w, OUT = weight.shape
    assert (E_w, IN_w) == (E, IN) and bias.shape == (E, OUT)

    out_dtype = x.dtype
    out_itemsize = jnp.dtype(out_dtype).itemsize

    # Optional bandwidth optimization: weights are read exactly once, so
    # streaming them (and x) as bf16 ~halves the dominant HBM traffic.
    if compute_dtype is not None:
        x = x.astype(compute_dtype)
        weight = weight.astype(compute_dtype)
    in_itemsize = jnp.dtype(x.dtype).itemsize
    sub = 32 // in_itemsize  # sublane packing granule (8 for f32, 16 for bf16)

    # ---- tile selection --------------------------------------------------
    # Lane-dense output: pad OUT to a multiple of 128 so stores are unmasked.
    OUT_p = _round_up(OUT, 128)
    if tn is None:
        tn = 512 if OUT_p % 512 == 0 else (256 if OUT_p % 256 == 0 else 128)
    tn = max(128, min(_round_up(tn, 128), OUT_p))
    while OUT_p % tn != 0:
        tn -= 128

    if tb is None:
        tb = min(512, _round_up(B, sub))
    tb = max(sub, min(_round_up(tb, sub), _round_up(B, sub)))

    # Shrink tiles until the double-buffered working set fits VMEM (v7x-safe).
    while (_working_set_bytes(1, tb, tn, IN, in_itemsize, out_itemsize)
           > _VMEM_WORKING_SET_BUDGET) and tb > sub:
        tb = max(sub, _round_up(tb // 2, sub))
    while (_working_set_bytes(1, tb, tn, IN, in_itemsize, out_itemsize)
           > _VMEM_WORKING_SET_BUDGET) and tn > 128:
        tn -= 128
        while OUT_p % tn != 0:
            tn -= 128
    # TODO(synk): add a K (IN) reduction grid axis ("arbitrary", f32 VMEM
    # accumulator + pl.when init/flush) for the rare case where one
    # (IN x 128) weight stripe alone exceeds the VMEM budget.

    B_p = _round_up(B, tb)

    # Pack several ensemble members per grid step when the per-member matmul
    # is much smaller than the MXU (amortizes the ~0.35us per-step overhead).
    if members_per_step is None:
        eb = 1
        if tb < 128:
            for d in range(1, E + 1):
                if (E % d == 0 and d * tb <= 512 and
                        _working_set_bytes(d, tb, tn, IN, in_itemsize, out_itemsize)
                        <= _VMEM_WORKING_SET_BUDGET):
                    eb = d
    else:
        eb = 1
        for d in range(1, min(E, int(members_per_step)) + 1):
            if E % d == 0:
                eb = d

    # ---- pad arrays to the chosen tiling ---------------------------------
    if B_p != B:
        x = jnp.pad(x, ((0, 0), (0, B_p - B), (0, 0)))
    if OUT_p != OUT:
        weight = jnp.pad(weight, ((0, 0), (0, 0), (0, OUT_p - OUT)))
        bias = jnp.pad(bias, ((0, 0), (0, OUT_p - OUT)))
    bias3 = bias.reshape(E, 1, OUT_p)  # keep bias blocks 2-D and lane-dense

    # Batch-tile axis innermost: the weight block index ignores it, so the
    # weight stays resident across batch tiles.
    grid = (E // eb, OUT_p // tn, B_p // tb)

    if eb == 1:
        kernel = _ensemble_fc_kernel_single
        x_spec = pl.BlockSpec((pl.Squeezed(), tb, IN), lambda e, n, b: (e, b, 0))
        w_spec = pl.BlockSpec((pl.Squeezed(), IN, tn), lambda e, n, b: (e, 0, n))
        b_spec = pl.BlockSpec((pl.Squeezed(), 1, tn), lambda e, n, b: (e, 0, n))
        o_spec = pl.BlockSpec((pl.Squeezed(), tb, tn), lambda e, n, b: (e, b, n))
    else:
        kernel = _ensemble_fc_kernel_packed
        x_spec = pl.BlockSpec((eb, tb, IN), lambda e, n, b: (e, b, 0))
        w_spec = pl.BlockSpec((eb, IN, tn), lambda e, n, b: (e, 0, n))
        b_spec = pl.BlockSpec((eb, 1, tn), lambda e, n, b: (e, 0, n))
        o_spec = pl.BlockSpec((eb, tb, tn), lambda e, n, b: (e, b, n))

    cost = pl.CostEstimate(
        flops=2 * E * B_p * IN * OUT_p,
        transcendentals=0,
        bytes_accessed=int(x.nbytes + weight.nbytes + bias3.nbytes
                           + E * B_p * OUT_p * out_itemsize),
    )

    out = pl.pallas_call(
        kernel,
        out_shape=jax.ShapeDtypeStruct((E, B_p, OUT_p), out_dtype),
        grid_spec=pltpu.PrefetchScalarGridSpec(
            num_scalar_prefetch=0,
            grid=grid,
            in_specs=[x_spec, w_spec, b_spec],
            out_specs=o_spec,
        ),
        compiler_params=pltpu.CompilerParams(
            dimension_semantics=("parallel", "parallel", "parallel"),
            vmem_limit_bytes=_VMEM_LIMIT_BYTES,
        ),
        cost_estimate=cost,
    )(x, weight, bias3)

    if B_p != B or OUT_p != OUT:
        out = out[:, :B, :OUT]
    return out


if __name__ == "__main__":
    key = jax.random.PRNGKey(0)
    kx, kw, kb, kx2, kw2, kb2 = jax.random.split(key, 6)

    # --- small per-member shapes: exercises ensemble packing + OUT padding ---
    E, B, IN, OUT = 4, 8, 32, 32
    x = jax.random.normal(kx, (E, B, IN), dtype=jnp.float32)
    w = jax.random.normal(kw, (E, IN, OUT), dtype=jnp.float32) * 0.1
    b = jax.random.normal(kb, (E, OUT), dtype=jnp.float32) * 0.01
    ref = jnp.einsum("ebi,eio->ebo", x, w) + b[:, None, :]

    out = jax.block_until_ready(ensemble_fc(x, w, b))
    assert out.shape == (E, B, OUT)
    assert jnp.allclose(out, ref, atol=1e-3, rtol=1e-3)

    # bf16-streamed variant (halves HBM traffic; f32 MXU accumulation)
    out_bf16 = jax.block_until_ready(ensemble_fc(x, w, b, compute_dtype=jnp.bfloat16))
    assert out_bf16.shape == (E, B, OUT)
    assert jnp.allclose(out_bf16, ref, atol=5e-2, rtol=5e-2)

    # --- larger per-member shapes: exercises batch/N tiling, squeezed path ---
    E2, B2, IN2, OUT2 = 2, 256, 128, 256
    x2 = jax.random.normal(kx2, (E2, B2, IN2), dtype=jnp.float32)
    w2 = jax.random.normal(kw2, (E2, IN2, OUT2), dtype=jnp.float32) * 0.05
    b2 = jax.random.normal(kb2, (E2, OUT2), dtype=jnp.float32) * 0.01
    ref2 = jnp.einsum("ebi,eio->ebo", x2, w2) + b2[:, None, :]

    out2 = jax.block_until_ready(ensemble_fc(x2, w2, b2, tb=128, tn=128))
    assert out2.shape == (E2, B2, OUT2)
    assert jnp.allclose(out2, ref2, atol=2e-2, rtol=2e-2)

    print("KERNEL_OK")
</pallas_src>

<mosaic_0001>
module attributes {stable_mosaic.version = 11 : i64} {
  func.func @_ensemble_fc_kernel_packed(%arg0: i32, %arg1: i32, %arg2: i32, %arg3: memref<4x8x32xf32, #tpu.memory_space<vmem>>, %arg4: memref<4x32x128xf32, #tpu.memory_space<vmem>>, %arg5: memref<4x1x128xf32, #tpu.memory_space<vmem>>, %arg6: memref<4x8x128xf32, #tpu.memory_space<vmem>>) attributes {dimension_semantics = [#tpu.dimension_semantics<parallel>, #tpu.dimension_semantics<parallel>, #tpu.dimension_semantics<parallel>], iteration_bounds = array<i64: 1, 1, 1>, scalar_prefetch = 0 : i64, scratch_operands = 0 : i64, tpu.core_type = #tpu.core_type<tc>, window_params = [{transform_indices = @transform_0, window_bounds = array<i64: 4, 8, 32>}, {transform_indices = @transform_1, window_bounds = array<i64: 4, 32, 128>}, {transform_indices = @transform_2, window_bounds = array<i64: 4, 1, 128>}, {transform_indices = @transform_3, window_bounds = array<i64: 4, 8, 128>}]} {
    %c0 = arith.constant 0 : index
    %c0_0 = arith.constant 0 : index
    %c0_1 = arith.constant 0 : index
    %0 = vector.load %arg3[%c0, %c0_0, %c0_1] : memref<4x8x32xf32, #tpu.memory_space<vmem>>, vector<4x8x32xf32>
    %c0_2 = arith.constant 0 : index
    %c0_3 = arith.constant 0 : index
    %c0_4 = arith.constant 0 : index
    %1 = vector.load %arg4[%c0_2, %c0_3, %c0_4] : memref<4x32x128xf32, #tpu.memory_space<vmem>>, vector<4x32x128xf32>
    "tpu.trace_start"() <{level = 10 : i32, message = "ebi,eio->ebo"}> : () -> ()
    %cst = arith.constant dense<0.000000e+00> : vector<4x8x128xf32>
    %2 = tpu.matmul %0, %1, %cst {dimension_numbers = #tpu.dot_dimension_numbers<[2], [1], [1], [2], [0, 0, 0, 1, 1, 2], [0], [0]>} : vector<4x8x32xf32>, vector<4x32x128xf32>, vector<4x8x128xf32> -> vector<4x8x128xf32>
    "tpu.trace_stop"() : () -> ()
    %c0_5 = arith.constant 0 : index
    %c0_6 = arith.constant 0 : index
    %c0_7 = arith.constant 0 : index
    %3 = vector.load %arg5[%c0_5, %c0_6, %c0_7] : memref<4x1x128xf32, #tpu.memory_space<vmem>>, vector<4x1x128xf32>
    %4 = vector.broadcast %3 : vector<4x1x128xf32> to vector<4x8x128xf32>
    %5 = arith.addf %2, %4 : vector<4x8x128xf32>
    %c0_8 = arith.constant 0 : index
    %c0_9 = arith.constant 0 : index
    %c0_10 = arith.constant 0 : index
    %6 = vector.load %arg6[%c0_8, %c0_9, %c0_10] : memref<4x8x128xf32, #tpu.memory_space<vmem>>, vector<4x8x128xf32>
    tpu.vector_store %arg6[%c0_8, %c0_9, %c0_10], %5 {strides = array<i32>} : memref<4x8x128xf32, #tpu.memory_space<vmem>>, vector<4x8x128xf32>,
    return
  }
  func.func @transform_0(%arg0: i32, %arg1: i32, %arg2: i32) -> (i32, i32, i32) {
    %c0_i32 = arith.constant 0 : i32
    %c0_i32_0 = arith.constant 0 : i32
    return %arg0, %arg2, %c0_i32 : i32, i32, i32
  }
  func.func @transform_1(%arg0: i32, %arg1: i32, %arg2: i32) -> (i32, i32, i32) {
    %c0_i32 = arith.constant 0 : i32
    %c0_i32_0 = arith.constant 0 : i32
    return %arg0, %c0_i32, %arg1 : i32, i32, i32
  }
  func.func @transform_2(%arg0: i32, %arg1: i32, %arg2: i32) -> (i32, i32, i32) {
    %c0_i32 = arith.constant 0 : i32
    %c0_i32_0 = arith.constant 0 : i32
    return %arg0, %c0_i32, %arg1 : i32, i32, i32
  }
  func.func @transform_3(%arg0: i32, %arg1: i32, %arg2: i32) -> (i32, i32, i32) {
    %c0_i32 = arith.constant 0 : i32
    return %arg0, %arg2, %arg1 : i32, i32, i32
  }
}

</mosaic_0001>

<llo_original>
// kernel: tpu_custom_call.1
$region0: #{tpu_custom_call.1}
  #allocation0 [shape = 'u32[]', space=smem, size = 0x4, offset = 0x4, fixed_abs, tag = 'smem constant byte address 0x4 - core index']
  #allocation1 [shape = 'u32[72,128]{1,0:T(1,128)}', space=vmem, size = 0x9000, scoped, tag = 'internal scratch']
  %s0 = inlined_call_operand.hbm [shape: f32[4,8,32], index: 0, kind: input, shape index: {}]
  %s1 = inlined_call_operand.hbm [shape: f32[4,32,128], index: 1, kind: input, shape index: {}]
  %s2 = inlined_call_operand.hbm [shape: f32[4,1,128], index: 2, kind: input, shape index: {}]
  %s3 = inlined_call_operand.hbm [shape: f32[4,8,128], index: 3, kind: output, shape index: {}]
  %s4 = sld [smem:[#allocation0]]
  $region34: #{tpu_custom_call.1} parent=0
    _
  %s6 = ssub.s32 1, %s4
  %s7 = scalar_select 0, %s6, %s4
  $region1: #{tpu_custom_call.1} parent=0
    #allocation2 [shape = 'u8[16384]{0}', space=vmem, size = 0x4000, scoped, tag = 'input window, operand 0, single buffered']
    #allocation3 [shape = 's32[1]{0}', space=sflag, size = 0x4, scoped, tag = 'scoped memory for tpu_custom_call.1']
    #allocation4 [shape = 's32[1]{0}', space=sflag, size = 0x4, scoped, tag = 'scoped memory for tpu_custom_call.1']
    #allocation5 [shape = 'u8[65536]{0}', space=vmem, size = 0x10000, scoped, tag = 'input window, operand 1, single buffered']
    #allocation6 [shape = 's32[1]{0}', space=sflag, size = 0x4, scoped, tag = 'scoped memory for tpu_custom_call.1']
    #allocation7 [shape = 'u8[2048]{0}', space=vmem, size = 0x800, scoped, tag = 'input window, operand 2, single buffered']
    #allocation8 [shape = 'u8[16384]{0}', space=vmem, size = 0x4000, scoped, tag = 'output window, operand 0, single buffered']
    %8 = vsyncpa [#allocation3], 0
    %9 = vsyncpa [#allocation6], 0
    %10 = vsyncpa [#allocation4], 0
    // Predicated region
    $region2: #{tpu_custom_call.1} parent=1 // pred_check
      _
    $region3: #{tpu_custom_call.1} parent=1 // pred_check_branch
      %12 = sbr.rel (0) target = $region5
    $region4: #{tpu_custom_call.1} parent=1 // pred_region
      %14 = vsyncadd [#allocation3], 0
      %s15 = sshll.u32 %s0, 4
      %s16 = int_to_ptr.hbm [resolvable:$true] %s15
      %s17 = sshll.u32 [#allocation2], 4
      %s18 = int_to_ptr.vmem [resolvable:$true] %s17
      %23 = dma.hbm_to_vmem [thread:$0]  %s16, 512, %s18, [#allocation3], 128, 128, 8
    $region5: #{tpu_custom_call.1} parent=1 // pred_fallthru
      _
    // Predicated region
    $region6: #{tpu_custom_call.1} parent=1 // pred_check
      _
    $region7: #{tpu_custom_call.1} parent=1 // pred_check_branch
      %25 = sbr.rel (0) target = $region9
    $region8: #{tpu_custom_call.1} parent=1 // pred_region
      %27 = vsyncadd [#allocation6], 0
      %s28 = sshll.u32 %s1, 4
      %s29 = int_to_ptr.hbm [resolvable:$true] %s28
      %s30 = sshll.u32 [#allocation5], 4
      %s31 = int_to_ptr.vmem [resolvable:$true] %s30
      %36 = dma.hbm_to_vmem [thread:$0]  %s29, 2048, %s31, [#allocation6], 128, 128, 8
    $region9: #{tpu_custom_call.1} parent=1 // pred_fallthru
      _
    // Predicated region
    $region10: #{tpu_custom_call.1} parent=1 // pred_check
      _
    $region11: #{tpu_custom_call.1} parent=1 // pred_check_branch
      %38 = sbr.rel (0) target = $region13
    $region12: #{tpu_custom_call.1} parent=1 // pred_region
      %40 = vsyncadd [#allocation6], 0
      %s41 = sshll.u32 %s2, 4
      %s42 = int_to_ptr.hbm [resolvable:$true] %s41
      %s43 = sshll.u32 [#allocation7], 4
      %s44 = int_to_ptr.vmem [resolvable:$true] %s43
      %49 = dma.hbm_to_vmem [thread:$0]  %s42, 64, %s44, [#allocation6], 16, 16, 1
    $region13: #{tpu_custom_call.1} parent=1 // pred_fallthru
      _
    // Predicated region
    $region14: #{tpu_custom_call.1} parent=1 // pred_check
      _
    $region15: #{tpu_custom_call.1} parent=1 // pred_check_branch
      %51 = sbr.rel (0) target = $region17
    $region16: #{tpu_custom_call.1} parent=1 // pred_region
      %53 = dma.done [#allocation3], 512
    $region17: #{tpu_custom_call.1} parent=1 // pred_fallthru
      _
    // Predicated region
    $region18: #{tpu_custom_call.1} parent=1 // pred_check
      _
    $region19: #{tpu_custom_call.1} parent=1 // pred_check_branch
      %55 = sbr.rel (0) target = $region21
    $region20: #{tpu_custom_call.1} parent=1 // pred_region
      %57 = dma.done [#allocation6], 2048
    $region21: #{tpu_custom_call.1} parent=1 // pred_fallthru
      _
    // Predicated region
    $region22: #{tpu_custom_call.1} parent=1 // pred_check
      _
    $region23: #{tpu_custom_call.1} parent=1 // pred_check_branch
      %59 = sbr.rel (0) target = $region25
    $region24: #{tpu_custom_call.1} parent=1 // pred_region
      %61 = dma.done [#allocation6], 64
    $region25: #{tpu_custom_call.1} parent=1 // pred_fallthru
      _
    %v62 = vld [vmem:[#allocation2] sm:$0xff]
    %v63 = vld [vmem:[#allocation2 + $0x8] sm:$0xff]
    %v64 = vld [vmem:[#allocation2 + $0x10] sm:$0xff]
    %v65 = vld [vmem:[#allocation2 + $0x18] sm:$0xff]
    %v66 = vld [vmem:[#allocation5] sm:$0xff]
    %v67 = vld [vmem:[#allocation5 + $0x8] sm:$0xff]
    %v68 = vld [vmem:[#allocation5 + $0x10] sm:$0xff]
    %v69 = vld [vmem:[#allocation5 + $0x18] sm:$0xff]
    %v70 = vld [vmem:[#allocation5 + $0x20] sm:$0xff]
    %v71 = vld [vmem:[#allocation5 + $0x28] sm:$0xff]
    %v72 = vld [vmem:[#allocation5 + $0x30] sm:$0xff]
    %v73 = vld [vmem:[#allocation5 + $0x38] sm:$0xff]
    %v74 = vld [vmem:[#allocation5 + $0x40] sm:$0xff]
    %v75 = vld [vmem:[#allocation5 + $0x48] sm:$0xff]
    %v76 = vld [vmem:[#allocation5 + $0x50] sm:$0xff]
    %v77 = vld [vmem:[#allocation5 + $0x58] sm:$0xff]
    %v78 = vld [vmem:[#allocation5 + $0x60] sm:$0xff]
    %v79 = vld [vmem:[#allocation5 + $0x68] sm:$0xff]
    %v80 = vld [vmem:[#allocation5 + $0x70] sm:$0xff]
    %v81 = vld [vmem:[#allocation5 + $0x78] sm:$0xff]
    %v82 = vld [vmem:[#allocation7] sm:$0x1]
    %v83 = vld [vmem:[#allocation7 + $0x1] sm:$0x1]
    %v84 = vld [vmem:[#allocation7 + $0x2] sm:$0x1]
    %v85 = vld [vmem:[#allocation7 + $0x3] sm:$0x1]
    %v90 = vperm.slane %v82, 0
    %v91 = vperm.slane %v83, 0
    %v92 = vperm.slane %v84, 0
    %v93 = vperm.slane %v85, 0
    %vm98 = vcmask 261120
    %v100 = vsel %vm98, %v62, 0
    %102 = vmatpush.msra.mxu0 0.0
    %103 = vmatpush.msra.mxu0 0.0
    %104 = vmatpush.msra.mxu0 0.0
    %105 = vmatpush.msra.mxu0 0.0
    %106 = vmatpush.msra.mxu0 0.0
    %107 = vmatpush.msra.mxu0 0.0
    %108 = vmatpush.msra.mxu0 0.0
    %109 = vmatpush.msra.mxu0 0.0
    %110 = vmatpush.msra.mxu0 0.0
    %111 = vmatpush.msra.mxu0 0.0
    %112 = vmatpush.msra.mxu0 0.0
    %113 = vmatpush.msra.mxu0 0.0
    %114 = vmatpush.msra.mxu0 %v69
    %115 = vmatpush.msra.mxu0 %v68
    %116 = vmatpush.msra.mxu0 %v67
    %117 = vmatpush.msra.mxu0 %v66
    %118 = vmatmul.f32.gmra.mxu0 %v100
    %v119 = vpop.f32.mrf.mxu0
    %v120 = vadd.f32 %v90, %v119
    %121 = vdwg.mxu0
    %v123 = vsel %vm98, %v63, 0
    %125 = vmatpush.msra.mxu0 0.0
    %126 = vmatpush.msra.mxu0 0.0
    %127 = vmatpush.msra.mxu0 0.0
    %128 = vmatpush.msra.mxu0 0.0
    %129 = vmatpush.msra.mxu0 0.0
    %130 = vmatpush.msra.mxu0 0.0
    %131 = vmatpush.msra.mxu0 0.0
    %132 = vmatpush.msra.mxu0 0.0
    %133 = vmatpush.msra.mxu0 0.0
    %134 = vmatpush.msra.mxu0 0.0
    %135 = vmatpush.msra.mxu0 0.0
    %136 = vmatpush.msra.mxu0 0.0
    %137 = vmatpush.msra.mxu0 %v73
    %138 = vmatpush.msra.mxu0 %v72
    %139 = vmatpush.msra.mxu0 %v71
    %140 = vmatpush.msra.mxu0 %v70
    %141 = vmatmul.f32.gmra.mxu0 %v123
    %v142 = vpop.f32.mrf.mxu0
    %v143 = vadd.f32 %v91, %v142
    %144 = vdwg.mxu0
    %v146 = vsel %vm98, %v64, 0
    %148 = vmatpush.msra.mxu0 0.0
    %149 = vmatpush.msra.mxu0 0.0
    %150 = vmatpush.msra.mxu0 0.0
    %151 = vmatpush.msra.mxu0 0.0
    %152 = vmatpush.msra.mxu0 0.0
    %153 = vmatpush.msra.mxu0 0.0
    %154 = vmatpush.msra.mxu0 0.0
    %155 = vmatpush.msra.mxu0 0.0
    %156 = vmatpush.msra.mxu0 0.0
    %157 = vmatpush.msra.mxu0 0.0
    %158 = vmatpush.msra.mxu0 0.0
    %159 = vmatpush.msra.mxu0 0.0
    %160 = vmatpush.msra.mxu0 %v77
    %161 = vmatpush.msra.mxu0 %v76
    %162 = vmatpush.msra.mxu0 %v75
    %163 = vmatpush.msra.mxu0 %v74
    %164 = vmatmul.f32.gmra.mxu0 %v146
    %v165 = vpop.f32.mrf.mxu0
    %v166 = vadd.f32 %v92, %v165
    %167 = vdwg.mxu0
    %v169 = vsel %vm98, %v65, 0
    %171 = vmatpush.msra.mxu0 0.0
    %172 = vmatpush.msra.mxu0 0.0
    %173 = vmatpush.msra.mxu0 0.0
    %174 = vmatpush.msra.mxu0 0.0
    %175 = vmatpush.msra.mxu0 0.0
    %176 = vmatpush.msra.mxu0 0.0
    %177 = vmatpush.msra.mxu0 0.0
    %178 = vmatpush.msra.mxu0 0.0
    %179 = vmatpush.msra.mxu0 0.0
    %180 = vmatpush.msra.mxu0 0.0
    %181 = vmatpush.msra.mxu0 0.0
    %182 = vmatpush.msra.mxu0 0.0
    %183 = vmatpush.msra.mxu0 %v81
    %184 = vmatpush.msra.mxu0 %v80
    %185 = vmatpush.msra.mxu0 %v79
    %186 = vmatpush.msra.mxu0 %v78
    %187 = vmatmul.f32.gmra.mxu0 %v169
    %v188 = vpop.f32.mrf.mxu0
    %v189 = vadd.f32 %v93, %v188
    %190 = vdwg.mxu0
    %191 = vst [vmem:[#allocation8] sm:$0xff] %v120
    %192 = vst [vmem:[#allocation8 + $0x8] sm:$0xff] %v143
    %193 = vst [vmem:[#allocation8 + $0x10] sm:$0xff] %v166
    %194 = vst [vmem:[#allocation8 + $0x18] sm:$0xff] %v189
    // Predicated region
    $region26: #{tpu_custom_call.1} parent=1 // pred_check
      _
    $region27: #{tpu_custom_call.1} parent=1 // pred_check_branch
      %196 = sbr.rel (0) target = $region29
    $region28: #{tpu_custom_call.1} parent=1 // pred_region
      %198 = vsyncadd [#allocation4], 0
      %s199 = sshll.u32 [#allocation8], 4
      %s200 = int_to_ptr.vmem [resolvable:$true] %s199
      %s201 = sshll.u32 %s3, 4
      %s202 = int_to_ptr.hbm [resolvable:$true] %s201
      %207 = dma.vmem_to_hbm [thread:$0]  %s200, 512, %s202, [#allocation4], 128, 128, 8
    $region29: #{tpu_custom_call.1} parent=1 // pred_fallthru
      _
    // Predicated region
    $region30: #{tpu_custom_call.1} parent=1 // pred_check
      _
    $region31: #{tpu_custom_call.1} parent=1 // pred_check_branch
      %209 = sbr.rel (0) target = $region33
    $region32: #{tpu_custom_call.1} parent=1 // pred_region
      %211 = dma.done [#allocation4], 512
    $region33: #{tpu_custom_call.1} parent=1 // pred_fallthru
      _
    %212 = vsyncpa [#allocation3], 1
    %213 = vsyncpa [#allocation6], 1
    %214 = vsyncpa [#allocation4], 1

</llo_original>
